<compile_context>
chip_gen: v7x
topology: tpu7x:2x2x1
jax: 0.10.0
libtpu: 0.0.40
codegen_flags: <defaults>
</compile_context>

<pallas_src>
import functools

import jax
import jax.numpy as jnp
from jax.experimental import pallas as pl
from jax.experimental.pallas import tpu as pltpu


def _se_kernel(x_ref, w1_ref, b1_ref, w2_ref, b2_ref, o_ref, *, inv_hw):
    # x_ref : (Bt, C, HW) input block, f32
    # w1    : (C, Cmid), b1: (1, Cmid)
    # w2    : (Cmid, C), b2: (1, C)

    # --- squeeze: global average pool over the spatial (lane) axis ---------
    # Block's last dim is the true HW (no padding), so the mean is exact.
    pooled = jnp.sum(x_ref[...], axis=-1) * inv_hw            # (Bt, C)

    # --- excitation: FC -> ReLU6 -> FC -> HardSigmoid, batched over Bt -----
    h = jnp.dot(pooled, w1_ref[...],
                preferred_element_type=jnp.float32) + b1_ref[...]
    h = jnp.clip(h, 0.0, 6.0)                                 # ReLU6

    s = jnp.dot(h, w2_ref[...],
                preferred_element_type=jnp.float32) + b2_ref[...]
    s = jnp.clip(s + 3.0, 0.0, 6.0) * (1.0 / 6.0)             # HardSigmoid

    # --- scale: re-read the input ref (O(1) vreg pressure, re-load hidden
    # under HBM DMA) and broadcast the per-channel gate over spatial ---------
    bt, c = s.shape
    o_ref[...] = x_ref[...] * s.reshape(bt, c, 1)


def _tpu_limits():
    """Returns (vmem_capacity_bytes, assumed_tensorcores) with safe fallbacks."""
    vmem = 128 << 20
    try:
        vmem = int(pltpu.get_tpu_info().vmem_capacity_bytes)
    except Exception:
        pass
    # Heuristic: 64 MiB/TC VMEM => v7x-class chip with 2 TensorCores/chip.
    cores = 2 if vmem <= (64 << 20) else 1
    return vmem, cores


def _pick_bt(B, per_batch_bytes, block_budget, min_steps):
    """Largest divisor of B whose block fits the budget, preferring a grid
    length of at least `min_steps` (for multi-TensorCore pipelining) when that
    is achievable without shrinking below a divisor of B (never pad B)."""
    divisors = [d for d in range(1, B + 1) if B % d == 0]
    fitting = [d for d in divisors if d * per_batch_bytes <= block_budget] or [1]
    for want in sorted({min_steps, max(1, min_steps // 2), 1}, reverse=True):
        preferred = [d for d in fitting if (B // d) >= want]
        if preferred:
            return max(preferred)
    return max(fitting)


def se_layer(x_nchw, w1, b1, w2, b2):
    """x_nchw: (B, C, H, W) float32. Weights follow PyTorch Linear convention:
    w1: (Cmid, C), b1: (Cmid,), w2: (C, Cmid), b2: (C,).  Returns (B, C, H, W)."""
    B, C, H, W = x_nchw.shape
    HW = H * W
    itemsize = jnp.dtype(x_nchw.dtype).itemsize

    # No HW padding and no batch padding: the block covers the full (C, HW)
    # extents, the grid tiles only the batch with bt a divisor of B.
    x = x_nchw.reshape(B, C, HW)

    # Transpose to (in, out) for `y @ W` inside the kernel; biases as 2-D rows.
    w1_t = w1.T                      # (C, Cmid)
    w2_t = w2.T                      # (Cmid, C)
    b1_2d = b1.reshape(1, -1)        # (1, Cmid)
    b2_2d = b2.reshape(1, -1)        # (1, C)
    weight_bytes = sum(int(a.size) * jnp.dtype(a.dtype).itemsize
                       for a in (w1_t, w2_t, b1_2d, b2_2d))

    # --- generation-aware block sizing -------------------------------------
    vmem_cap, cores = _tpu_limits()
    # Pipeline footprint ~= 2 (in + out) x 2 (double buffer) x block + weights.
    # Keep that within ~60% of physical VMEM.  Per-step overhead is ~0.35us,
    # so target big blocks: ~16 MiB on 128-MiB chips (v5e/v6e), ~8 MiB on
    # 64-MiB/TC chips (v7x).
    target_block = (16 << 20) if vmem_cap >= (128 << 20) else (8 << 20)
    budget_total = int(0.6 * vmem_cap) - weight_bytes - (2 << 20)
    block_budget = max(1 << 20, min(target_block, budget_total // 4))

    per_batch_bytes = C * HW * itemsize
    # On 2-TC chips aim for >=2 pipelined steps per core; on single-TC chips
    # never split the grid artificially (biggest block wins).
    min_steps = 2 * cores if cores > 1 else 1
    bt = _pick_bt(B, per_batch_bytes, block_budget, min_steps)
    block_bytes = bt * per_batch_bytes
    # TODO(synk): if a single batch (bt=1) still exceeds the VMEM budget on
    # 64-MiB chips, fall back to a two-pass (pool pass + scale pass) kernel.

    vmem_limit = 4 * block_bytes + 2 * weight_bytes + (2 << 20)
    vmem_limit = int(min(max(vmem_limit, 16 << 20), int(0.9 * vmem_cap)))

    kernel = functools.partial(_se_kernel, inv_hw=1.0 / HW)

    out = pl.pallas_call(
        kernel,
        out_shape=jax.ShapeDtypeStruct((B, C, HW), x.dtype),
        grid_spec=pltpu.PrefetchScalarGridSpec(
            num_scalar_prefetch=0,
            grid=(B // bt,),
            in_specs=[
                pl.BlockSpec((bt, C, HW), lambda b: (b, 0, 0)),       # x
                # Weights/biases: full-array blocks with constant index_map
                # -> fetched once, VMEM-resident across the whole grid.
                pl.BlockSpec(w1_t.shape, lambda b: (0, 0)),           # W1^T
                pl.BlockSpec(b1_2d.shape, lambda b: (0, 0)),          # b1
                pl.BlockSpec(w2_t.shape, lambda b: (0, 0)),           # W2^T
                pl.BlockSpec(b2_2d.shape, lambda b: (0, 0)),          # b2
            ],
            out_specs=pl.BlockSpec((bt, C, HW), lambda b: (b, 0, 0)),
        ),
        compiler_params=pltpu.CompilerParams(
            dimension_semantics=("parallel",),
            vmem_limit_bytes=vmem_limit,
        ),
    )(x, w1_t, b1_2d, w2_t, b2_2d)

    return out.reshape(B, C, H, W)


def _reference(x, w1, b1, w2, b2):
    # pure-JAX reference of SELayer.forward
    y = jnp.mean(x, axis=(2, 3))                       # (B, C)
    h = jnp.clip(y @ w1.T + b1, 0.0, 6.0)              # ReLU6
    s = jnp.clip((h @ w2.T + b2) + 3.0, 0.0, 6.0) / 6.0
    return x * s[:, :, None, None]


if __name__ == "__main__":
    # Shapes consistent with SELayer(in_channels=64, reduction_ratio=16)
    B, C, H, W = 2, 64, 16, 16
    Cmid = C // 16                                     # = 4

    key = jax.random.PRNGKey(0)
    kx, k1, k2, k3, k4 = jax.random.split(key, 5)
    x = jax.random.normal(kx, (B, C, H, W), dtype=jnp.float32)
    w1 = jax.random.normal(k1, (Cmid, C), dtype=jnp.float32) * 0.1
    b1 = jax.random.normal(k2, (Cmid,), dtype=jnp.float32) * 0.1
    w2 = jax.random.normal(k3, (C, Cmid), dtype=jnp.float32) * 0.1
    b2 = jax.random.normal(k4, (C,), dtype=jnp.float32) * 0.1

    out = se_layer(x, w1, b1, w2, b2)
    out = jax.block_until_ready(out)

    ref = _reference(x, w1, b1, w2, b2)
    assert out.shape == (B, C, H, W)
    assert jnp.allclose(out, ref, atol=1e-5, rtol=1e-5), "mismatch vs reference"

    # Also exercise a non-128-multiple spatial size (masked trailing store,
    # no padding copies) and an odd batch (divisor-based bt selection).
    B2, H2, W2 = 3, 14, 14
    x2 = jax.random.normal(kx, (B2, C, H2, W2), dtype=jnp.float32)
    out2 = jax.block_until_ready(se_layer(x2, w1, b1, w2, b2))
    ref2 = _reference(x2, w1, b1, w2, b2)
    assert out2.shape == (B2, C, H2, W2)
    assert jnp.allclose(out2, ref2, atol=1e-5, rtol=1e-5), "mismatch (unpadded HW)"

    print("KERNEL_OK")
</pallas_src>

<mosaic_0001>
module attributes {stable_mosaic.version = 11 : i64} {
  func.func @_se_kernel(%arg0: i32, %arg1: memref<2x64x256xf32, #tpu.memory_space<vmem>>, %arg2: memref<64x4xf32, #tpu.memory_space<vmem>>, %arg3: memref<1x4xf32, #tpu.memory_space<vmem>>, %arg4: memref<4x64xf32, #tpu.memory_space<vmem>>, %arg5: memref<1x64xf32, #tpu.memory_space<vmem>>, %arg6: memref<2x64x256xf32, #tpu.memory_space<vmem>>) attributes {dimension_semantics = [#tpu.dimension_semantics<parallel>], iteration_bounds = array<i64: 1>, scalar_prefetch = 0 : i64, scratch_operands = 0 : i64, tpu.core_type = #tpu.core_type<tc>, window_params = [{transform_indices = @transform_0, window_bounds = array<i64: 2, 64, 256>}, {pipeline_mode = #tpu.pipeline_mode<synchronous>, transform_indices = @transform_1, window_bounds = array<i64: 64, 4>}, {pipeline_mode = #tpu.pipeline_mode<synchronous>, transform_indices = @transform_2, window_bounds = array<i64: 1, 4>}, {pipeline_mode = #tpu.pipeline_mode<synchronous>, transform_indices = @transform_3, window_bounds = array<i64: 4, 64>}, {pipeline_mode = #tpu.pipeline_mode<synchronous>, transform_indices = @transform_4, window_bounds = array<i64: 1, 64>}, {transform_indices = @transform_5, window_bounds = array<i64: 2, 64, 256>}]} {
    %c0 = arith.constant 0 : index
    %c0_0 = arith.constant 0 : index
    %c0_1 = arith.constant 0 : index
    %0 = vector.load %arg1[%c0, %c0_0, %c0_1] : memref<2x64x256xf32, #tpu.memory_space<vmem>>, vector<2x64x256xf32>
    %cst = arith.constant dense<0.000000e+00> : vector<2x64xf32>
    %1 = vector.multi_reduction <add>, %0, %cst [2] : vector<2x64x256xf32> to vector<2x64xf32>
    %cst_2 = arith.constant 3.906250e-03 : f32
    %2 = vector.broadcast %cst_2 : f32 to vector<2x64xf32>
    %3 = arith.mulf %1, %2 : vector<2x64xf32>
    %c0_3 = arith.constant 0 : index
    %c0_4 = arith.constant 0 : index
    %4 = vector.load %arg2[%c0_3, %c0_4] : memref<64x4xf32, #tpu.memory_space<vmem>>, vector<64x4xf32>
    %cst_5 = arith.constant dense<0.000000e+00> : vector<2x4xf32>
    %5 = tpu.matmul %3, %4, %cst_5 {dimension_numbers = #tpu.dot_dimension_numbers<[1], [0], [0], [1], [0, 0, 1, 1], [], []>} : vector<2x64xf32>, vector<64x4xf32>, vector<2x4xf32> -> vector<2x4xf32>
    %c0_6 = arith.constant 0 : index
    %c0_7 = arith.constant 0 : index
    %6 = vector.load %arg3[%c0_6, %c0_7] : memref<1x4xf32, #tpu.memory_space<vmem>>, vector<1x4xf32>
    %7 = vector.broadcast %6 : vector<1x4xf32> to vector<2x4xf32>
    %8 = arith.addf %5, %7 : vector<2x4xf32>
    %cst_8 = arith.constant 0.000000e+00 : f32
    %cst_9 = arith.constant 6.000000e+00 : f32
    %9 = vector.broadcast %cst_8 : f32 to vector<2x4xf32>
    %10 = arith.maximumf %9, %8 : vector<2x4xf32>
    %11 = vector.broadcast %cst_9 : f32 to vector<2x4xf32>
    %12 = arith.minimumf %11, %10 : vector<2x4xf32>
    %c0_10 = arith.constant 0 : index
    %c0_11 = arith.constant 0 : index
    %13 = vector.load %arg4[%c0_10, %c0_11] : memref<4x64xf32, #tpu.memory_space<vmem>>, vector<4x64xf32>
    %cst_12 = arith.constant dense<0.000000e+00> : vector<2x64xf32>
    %14 = tpu.matmul %12, %13, %cst_12 {dimension_numbers = #tpu.dot_dimension_numbers<[1], [0], [0], [1], [0, 0, 1, 1], [], []>} : vector<2x4xf32>, vector<4x64xf32>, vector<2x64xf32> -> vector<2x64xf32>
    %c0_13 = arith.constant 0 : index
    %c0_14 = arith.constant 0 : index
    %15 = vector.load %arg5[%c0_13, %c0_14] : memref<1x64xf32, #tpu.memory_space<vmem>>, vector<1x64xf32>
    %16 = vector.broadcast %15 : vector<1x64xf32> to vector<2x64xf32>
    %17 = arith.addf %14, %16 : vector<2x64xf32>
    %cst_15 = arith.constant 3.000000e+00 : f32
    %18 = vector.broadcast %cst_15 : f32 to vector<2x64xf32>
    %19 = arith.addf %17, %18 : vector<2x64xf32>
    %cst_16 = arith.constant 0.000000e+00 : f32
    %cst_17 = arith.constant 6.000000e+00 : f32
    %20 = vector.broadcast %cst_16 : f32 to vector<2x64xf32>
    %21 = arith.maximumf %20, %19 : vector<2x64xf32>
    %22 = vector.broadcast %cst_17 : f32 to vector<2x64xf32>
    %23 = arith.minimumf %22, %21 : vector<2x64xf32>
    %cst_18 = arith.constant 0.166666672 : f32
    %24 = vector.broadcast %cst_18 : f32 to vector<2x64xf32>
    %25 = arith.mulf %23, %24 : vector<2x64xf32>
    %c0_19 = arith.constant 0 : index
    %c0_20 = arith.constant 0 : index
    %c0_21 = arith.constant 0 : index
    %26 = vector.load %arg1[%c0_19, %c0_20, %c0_21] : memref<2x64x256xf32, #tpu.memory_space<vmem>>, vector<2x64x256xf32>
    %27 = vector.shape_cast %25 : vector<2x64xf32> to vector<2x64x1xf32>
    %28 = vector.broadcast %27 : vector<2x64x1xf32> to vector<2x64x256xf32>
    %29 = arith.mulf %26, %28 : vector<2x64x256xf32>
    %c0_22 = arith.constant 0 : index
    %c0_23 = arith.constant 0 : index
    %c0_24 = arith.constant 0 : index
    %30 = vector.load %arg6[%c0_22, %c0_23, %c0_24] : memref<2x64x256xf32, #tpu.memory_space<vmem>>, vector<2x64x256xf32>
    tpu.vector_store %arg6[%c0_22, %c0_23, %c0_24], %29 {strides = array<i32>} : memref<2x64x256xf32, #tpu.memory_space<vmem>>, vector<2x64x256xf32>,
    return
  }
  func.func @transform_0(%arg0: i32) -> (i32, i32, i32) {
    %c0_i32 = arith.constant 0 : i32
    %c0_i32_0 = arith.constant 0 : i32
    %c0_i32_1 = arith.constant 0 : i32
    return %arg0, %c0_i32, %c0_i32_0 : i32, i32, i32
  }
  func.func @transform_1(%arg0: i32) -> (i32, i32) {
    %c0_i32 = arith.constant 0 : i32
    %c0_i32_0 = arith.constant 0 : i32
    %c0_i32_1 = arith.constant 0 : i32
    return %c0_i32, %c0_i32_0 : i32, i32
  }
  func.func @transform_2(%arg0: i32) -> (i32, i32) {
    %c0_i32 = arith.constant 0 : i32
    %c0_i32_0 = arith.constant 0 : i32
    %c0_i32_1 = arith.constant 0 : i32
    return %c0_i32, %c0_i32_0 : i32, i32
  }
  func.func @transform_3(%arg0: i32) -> (i32, i32) {
    %c0_i32 = arith.constant 0 : i32
    %c0_i32_0 = arith.constant 0 : i32
    %c0_i32_1 = arith.constant 0 : i32
    return %c0_i32, %c0_i32_0 : i32, i32
  }
  func.func @transform_4(%arg0: i32) -> (i32, i32) {
    %c0_i32 = arith.constant 0 : i32
    %c0_i32_0 = arith.constant 0 : i32
    %c0_i32_1 = arith.constant 0 : i32
    return %c0_i32, %c0_i32_0 : i32, i32
  }
  func.func @transform_5(%arg0: i32) -> (i32, i32, i32) {
    %c0_i32 = arith.constant 0 : i32
    %c0_i32_0 = arith.constant 0 : i32
    %c0_i32_1 = arith.constant 0 : i32
    return %arg0, %c0_i32, %c0_i32_0 : i32, i32, i32
  }
}

</mosaic_0001>

<llo_original>
// kernel: tpu_custom_call.1
$region0: #{tpu_custom_call.1}
  #allocation0 [shape = 'u32[]', space=smem, size = 0x4, offset = 0x4, fixed_abs, tag = 'smem constant byte address 0x4 - core index']
  #allocation1 [shape = 'u32[144,128]{1,0:T(1,128)}', space=vmem, size = 0x12000, scoped, tag = 'internal scratch']
  %s0 = inlined_call_operand.hbm [shape: f32[2,64,256], index: 0, kind: input, shape index: {}]
  %s1 = inlined_call_operand.vmem [shape: f32[64,4], index: 1, kind: input, shape index: {}]
  %s2 = inlined_call_operand.vmem [shape: f32[1,4], index: 2, kind: input, shape index: {}]
  %s3 = inlined_call_operand.vmem [shape: f32[4,64], index: 3, kind: input, shape index: {}]
  %s4 = inlined_call_operand.vmem [shape: f32[1,64], index: 4, kind: input, shape index: {}]
  %s5 = inlined_call_operand.hbm [shape: f32[2,64,256], index: 5, kind: output, shape index: {}]
  %s6 = sld [smem:[#allocation0]]
  $region34: #{tpu_custom_call.1} parent=0
    _
  %s8 = ssub.s32 1, %s6
  %s9 = scalar_select 0, %s8, %s6
  $region1: #{tpu_custom_call.1} parent=0
    #allocation2 [shape = 'u8[131072]{0}', space=vmem, size = 0x20000, scoped, tag = 'input window, operand 0, single buffered']
    #allocation3 [shape = 's32[1]{0}', space=sflag, size = 0x4, scoped, tag = 'scoped memory for tpu_custom_call.1']
    #allocation4 [shape = 's32[1]{0}', space=sflag, size = 0x4, scoped, tag = 'scoped memory for tpu_custom_call.1']
    #allocation5 [shape = 'u8[131072]{0}', space=vmem, size = 0x20000, scoped, tag = 'output window, operand 0, single buffered']
    %10 = vsyncpa [#allocation3], 0
    %11 = vsyncpa [#allocation4], 0
    // Predicated region
    $region2: #{tpu_custom_call.1} parent=1 // pred_check
      _
    $region3: #{tpu_custom_call.1} parent=1 // pred_check_branch
      %13 = sbr.rel (0) target = $region5
    $region4: #{tpu_custom_call.1} parent=1 // pred_region
      %s15 = ssub.s32 4096, 4096
      %16 = vsyncadd [#allocation3], %s15
      %s17 = sshll.u32 [#allocation2], 4
      %s18 = int_to_ptr.vmem [resolvable:$true] %s17
      %23 = dma.hbm_to_vmem [thread:$0]  %s0, 4096, %s18, [#allocation3], 256, 256, 16
    $region5: #{tpu_custom_call.1} parent=1 // pred_fallthru
      _
    // Predicated region
    $region6: #{tpu_custom_call.1} parent=1 // pred_check
      _
    $region7: #{tpu_custom_call.1} parent=1 // pred_check_branch
      %25 = sbr.rel (0) target = $region9
    $region8: #{tpu_custom_call.1} parent=1 // pred_region
      _
    $region9: #{tpu_custom_call.1} parent=1 // pred_fallthru
      _
    // Predicated region
    $region10: #{tpu_custom_call.1} parent=1 // pred_check
      _
    $region11: #{tpu_custom_call.1} parent=1 // pred_check_branch
      %27 = sbr.rel (0) target = $region13
    $region12: #{tpu_custom_call.1} parent=1 // pred_region
      _
    $region13: #{tpu_custom_call.1} parent=1 // pred_fallthru
      _
    // Predicated region
    $region14: #{tpu_custom_call.1} parent=1 // pred_check
      _
    $region15: #{tpu_custom_call.1} parent=1 // pred_check_branch
      %29 = sbr.rel (0) target = $region17
    $region16: #{tpu_custom_call.1} parent=1 // pred_region
      _
    $region17: #{tpu_custom_call.1} parent=1 // pred_fallthru
      _
    // Predicated region
    $region18: #{tpu_custom_call.1} parent=1 // pred_check
      _
    $region19: #{tpu_custom_call.1} parent=1 // pred_check_branch
      %31 = sbr.rel (0) target = $region21
    $region20: #{tpu_custom_call.1} parent=1 // pred_region
      _
    $region21: #{tpu_custom_call.1} parent=1 // pred_fallthru
      _
    // Predicated region
    $region22: #{tpu_custom_call.1} parent=1 // pred_check
      _
    $region23: #{tpu_custom_call.1} parent=1 // pred_check_branch
      %33 = sbr.rel (0) target = $region25
    $region24: #{tpu_custom_call.1} parent=1 // pred_region
      %34 = dma.done [#allocation3], 4096
    $region25: #{tpu_custom_call.1} parent=1 // pred_fallthru
      _
    %v35 = vld [vmem:[#allocation2] sm:$0xff]
    %v36 = vld [vmem:[#allocation2 + $0x8] sm:$0xff]
    %v37 = vld [vmem:[#allocation2 + $0x10] sm:$0xff]
    %v38 = vld [vmem:[#allocation2 + $0x18] sm:$0xff]
    %v39 = vld [vmem:[#allocation2 + $0x20] sm:$0xff]
    %v40 = vld [vmem:[#allocation2 + $0x28] sm:$0xff]
    %v41 = vld [vmem:[#allocation2 + $0x30] sm:$0xff]
    %v42 = vld [vmem:[#allocation2 + $0x38] sm:$0xff]
    %v43 = vld [vmem:[#allocation2 + $0x40] sm:$0xff]
    %v44 = vld [vmem:[#allocation2 + $0x48] sm:$0xff]
    %v45 = vld [vmem:[#allocation2 + $0x50] sm:$0xff]
    %v46 = vld [vmem:[#allocation2 + $0x58] sm:$0xff]
    %v47 = vld [vmem:[#allocation2 + $0x60] sm:$0xff]
    %v48 = vld [vmem:[#allocation2 + $0x68] sm:$0xff]
    %v49 = vld [vmem:[#allocation2 + $0x70] sm:$0xff]
    %v50 = vld [vmem:[#allocation2 + $0x78] sm:$0xff]
    %v51 = vld [vmem:[#allocation2 + $0x80] sm:$0xff]
    %v52 = vld [vmem:[#allocation2 + $0x88] sm:$0xff]
    %v53 = vld [vmem:[#allocation2 + $0x90] sm:$0xff]
    %v54 = vld [vmem:[#allocation2 + $0x98] sm:$0xff]
    %v55 = vld [vmem:[#allocation2 + $0xa0] sm:$0xff]
    %v56 = vld [vmem:[#allocation2 + $0xa8] sm:$0xff]
    %v57 = vld [vmem:[#allocation2 + $0xb0] sm:$0xff]
    %v58 = vld [vmem:[#allocation2 + $0xb8] sm:$0xff]
    %v59 = vld [vmem:[#allocation2 + $0xc0] sm:$0xff]
    %v60 = vld [vmem:[#allocation2 + $0xc8] sm:$0xff]
    %v61 = vld [vmem:[#allocation2 + $0xd0] sm:$0xff]
    %v62 = vld [vmem:[#allocation2 + $0xd8] sm:$0xff]
    %v63 = vld [vmem:[#allocation2 + $0xe0] sm:$0xff]
    %v64 = vld [vmem:[#allocation2 + $0xe8] sm:$0xff]
    %v65 = vld [vmem:[#allocation2 + $0xf0] sm:$0xff]
    %v66 = vld [vmem:[#allocation2 + $0xf8] sm:$0xff]
    %v67 = vadd.f32 %v35, %v36
    %68 = vadd.xlane.f32.xlu0 %v67
    %v69 = vpop.xlane.xlu0 %68
    %v70 = vadd.f32 %v37, %v38
    %71 = vadd.xlane.f32.xlu0 %v70
    %v72 = vpop.xlane.xlu0 %71
    %v73 = vadd.f32 %v39, %v40
    %74 = vadd.xlane.f32.xlu0 %v73
    %v75 = vpop.xlane.xlu0 %74
    %v76 = vadd.f32 %v41, %v42
    %77 = vadd.xlane.f32.xlu0 %v76
    %v78 = vpop.xlane.xlu0 %77
    %v79 = vadd.f32 %v43, %v44
    %80 = vadd.xlane.f32.xlu0 %v79
    %v81 = vpop.xlane.xlu0 %80
    %v82 = vadd.f32 %v45, %v46
    %83 = vadd.xlane.f32.xlu0 %v82
    %v84 = vpop.xlane.xlu0 %83
    %v85 = vadd.f32 %v47, %v48
    %86 = vadd.xlane.f32.xlu0 %v85
    %v87 = vpop.xlane.xlu0 %86
    %v88 = vadd.f32 %v49, %v50
    %89 = vadd.xlane.f32.xlu0 %v88
    %v90 = vpop.xlane.xlu0 %89
    %v91 = vadd.f32 %v51, %v52
    %92 = vadd.xlane.f32.xlu0 %v91
    %v93 = vpop.xlane.xlu0 %92
    %v94 = vadd.f32 %v53, %v54
    %95 = vadd.xlane.f32.xlu0 %v94
    %v96 = vpop.xlane.xlu0 %95
    %v97 = vadd.f32 %v55, %v56
    %98 = vadd.xlane.f32.xlu0 %v97
    %v99 = vpop.xlane.xlu0 %98
    %v100 = vadd.f32 %v57, %v58
    %101 = vadd.xlane.f32.xlu0 %v100
    %v102 = vpop.xlane.xlu0 %101
    %v103 = vadd.f32 %v59, %v60
    %104 = vadd.xlane.f32.xlu0 %v103
    %v105 = vpop.xlane.xlu0 %104
    %v106 = vadd.f32 %v61, %v62
    %107 = vadd.xlane.f32.xlu0 %v106
    %v108 = vpop.xlane.xlu0 %107
    %v109 = vadd.f32 %v63, %v64
    %110 = vadd.xlane.f32.xlu0 %v109
    %v111 = vpop.xlane.xlu0 %110
    %v112 = vadd.f32 %v65, %v66
    %113 = vadd.xlane.f32.xlu0 %v112
    %v114 = vpop.xlane.xlu0 %113
    %v115 = vmul.f32 %v69, 0.00390625
    %v116 = vmul.f32 %v72, 0.00390625
    %v117 = vmul.f32 %v75, 0.00390625
    %v118 = vmul.f32 %v78, 0.00390625
    %v119 = vmul.f32 %v81, 0.00390625
    %v120 = vmul.f32 %v84, 0.00390625
    %v121 = vmul.f32 %v87, 0.00390625
    %v122 = vmul.f32 %v90, 0.00390625
    %v123 = vmul.f32 %v93, 0.00390625
    %v124 = vmul.f32 %v96, 0.00390625
    %v125 = vmul.f32 %v99, 0.00390625
    %v126 = vmul.f32 %v102, 0.00390625
    %v127 = vmul.f32 %v105, 0.00390625
    %v128 = vmul.f32 %v108, 0.00390625
    %v129 = vmul.f32 %v111, 0.00390625
    %v130 = vmul.f32 %v114, 0.00390625
    %v131 = vld [vmem:[%s1] sm:$0xff]
    %v132 = vld [vmem:[%s1 + $0x8] sm:$0xff]
    %v133 = vld [vmem:[%s1 + $0x10] sm:$0xff]
    %v134 = vld [vmem:[%s1 + $0x18] sm:$0xff]
    %v135 = vld [vmem:[%s1 + $0x20] sm:$0xff]
    %v136 = vld [vmem:[%s1 + $0x28] sm:$0xff]
    %v137 = vld [vmem:[%s1 + $0x30] sm:$0xff]
    %v138 = vld [vmem:[%s1 + $0x38] sm:$0xff]
    %v139 = vld [vmem:[%s2] sm:$0x1]
    %v141 = vlaneseq
    %v142 = vshrl.u32 %v141, 7
    %v143 = vsub.s32 0, %v142
    %v144 = vrot.slane %v139, %v143
    %v162 = vlaneseq
    %v163 = vand.u32 %v162, 127
    %v164 = vlaneseq
    %v165 = vshrl.u32 %v164, 7
    %v166 = vsub.s32 %v163, %v165
    %v167 = vrot.slane %v115, %v166
    %v168 = vadd.s32 %v163, 4294967288
    %v169 = vlaneseq
    %v170 = vshrl.u32 %v169, 7
    %v171 = vsub.s32 %v168, %v170
    %v172 = vrot.slane %v116, %v171
    %vm173 = vcmask 130112
    %v174 = vsel %vm173, %v172, %v167
    %v175 = vadd.s32 %v163, 4294967280
    %v176 = vlaneseq
    %v177 = vshrl.u32 %v176, 7
    %v178 = vsub.s32 %v175, %v177
    %v179 = vrot.slane %v117, %v178
    %vm180 = vcmask 195712
    %v181 = vsel %vm180, %v179, %v174
    %v182 = vadd.s32 %v163, 4294967272
    %v183 = vlaneseq
    %v184 = vshrl.u32 %v183, 7
    %v185 = vsub.s32 %v182, %v184
    %v186 = vrot.slane %v118, %v185
    %vm187 = vcmask 261312
    %v188 = vsel %vm187, %v186, %v181
    %v189 = vadd.s32 %v163, 4294967264
    %v190 = vlaneseq
    %v191 = vshrl.u32 %v190, 7
    %v192 = vsub.s32 %v189, %v191
    %v193 = vrot.slane %v119, %v192
    %vm194 = vcmask 326912
    %v195 = vsel %vm194, %v193, %v188
    %v196 = vadd.s32 %v163, 4294967256
    %v197 = vlaneseq
    %v198 = vshrl.u32 %v197, 7
    %v199 = vsub.s32 %v196, %v198
    %v200 = vrot.slane %v120, %v199
    %vm201 = vcmask 392512
    %v202 = vsel %vm201, %v200, %v195
    %v203 = vadd.s32 %v163, 4294967248
    %v204 = vlaneseq
    %v205 = vshrl.u32 %v204, 7
    %v206 = vsub.s32 %v203, %v205
    %v207 = vrot.slane %v121, %v206
    %vm208 = vcmask 458112
    %v209 = vsel %vm208, %v207, %v202
    %v210 = vadd.s32 %v163, 4294967240
    %v211 = vlaneseq
    %v212 = vshrl.u32 %v211, 7
    %v213 = vsub.s32 %v210, %v212
    %v214 = vrot.slane %v122, %v213
    %vm215 = vcmask 523712
    %v216 = vsel %vm215, %v214, %v209
    %v217 = vlaneseq
    %v218 = vshrl.u32 %v217, 7
    %v219 = vsub.s32 %v163, %v218
    %v220 = vrot.slane %v123, %v219
    %v221 = vlaneseq
    %v222 = vshrl.u32 %v221, 7
    %v223 = vsub.s32 %v168, %v222
    %v224 = vrot.slane %v124, %v223
    %v225 = vsel %vm173, %v224, %v220
    %v226 = vlaneseq
    %v227 = vshrl.u32 %v226, 7
    %v228 = vsub.s32 %v175, %v227
    %v229 = vrot.slane %v125, %v228
    %v230 = vsel %vm180, %v229, %v225
    %v231 = vlaneseq
    %v232 = vshrl.u32 %v231, 7
    %v233 = vsub.s32 %v182, %v232
    %v234 = vrot.slane %v126, %v233
    %v235 = vsel %vm187, %v234, %v230
    %v236 = vlaneseq
    %v237 = vshrl.u32 %v236, 7
    %v238 = vsub.s32 %v189, %v237
    %v239 = vrot.slane %v127, %v238
    %v240 = vsel %vm194, %v239, %v235
    %v241 = vlaneseq
    %v242 = vshrl.u32 %v241, 7
    %v243 = vsub.s32 %v196, %v242
    %v244 = vrot.slane %v128, %v243
    %v245 = vsel %vm201, %v244, %v240
    %v246 = vlaneseq
    %v247 = vshrl.u32 %v246, 7
    %v248 = vsub.s32 %v203, %v247
    %v249 = vrot.slane %v129, %v248
    %v250 = vsel %vm208, %v249, %v245
    %v251 = vlaneseq
    %v252 = vshrl.u32 %v251, 7
    %v253 = vsub.s32 %v210, %v252
    %v254 = vrot.slane %v130, %v253
    %v255 = vsel %vm215, %v254, %v250
    %vm256 = vcmask 1041409
    %v257 = vsel %vm256, %v255, %v216
    %vm258 = vcmask 523264
    %v259 = vsel %vm258, %v257, 0
    %261 = vmatprep.subr.mxu0 0.0
    %262 = vmatpush1.msra.mxu0 %v131
    %263 = vmatprep.subr.mxu0 0.0
    %264 = vmatpush1.msra.mxu0 %v132
    %265 = vmatprep.subr.mxu0 0.0
    %266 = vmatpush1.msra.mxu0 %v133
    %267 = vmatprep.subr.mxu0 0.0
    %268 = vmatpush1.msra.mxu0 %v134
    %269 = vmatprep.subr.mxu0 0.0
    %270 = vmatpush1.msra.mxu0 %v135
    %271 = vmatprep.subr.mxu0 0.0
    %272 = vmatpush1.msra.mxu0 %v136
    %273 = vmatprep.subr.mxu0 0.0
    %274 = vmatpush1.msra.mxu0 %v137
    %275 = vmatprep.subr.mxu0 0.0
    %276 = vmatpush1.msra.mxu0 %v138
    %277 = vmatprep.subr.mxu0 0.0
    %278 = vmatpush1.msra.mxu0 0.0
    %279 = vmatprep.subr.mxu0 0.0
    %280 = vmatpush1.msra.mxu0 0.0
    %281 = vmatprep.subr.mxu0 0.0
    %282 = vmatpush1.msra.mxu0 0.0
    %283 = vmatprep.subr.mxu0 0.0
    %284 = vmatpush1.msra.mxu0 0.0
    %285 = vmatprep.subr.mxu0 0.0
    %286 = vmatpush1.msra.mxu0 0.0
    %287 = vmatprep.subr.mxu0 0.0
    %288 = vmatpush1.msra.mxu0 0.0
    %289 = vmatprep.subr.mxu0 0.0
    %290 = vmatpush1.msra.mxu0 0.0
    %291 = vmatprep.subr.mxu0 0.0
    %292 = vmatpush1.msra.mxu0 0.0
    %293 = vmatprep.subr.mxu0 0.0
    %294 = vmatpush1.msra.mxu0 0.0
    %295 = vmatprep.subr.mxu0 0.0
    %296 = vmatpush1.msra.mxu0 0.0
    %297 = vmatprep.subr.mxu0 0.0
    %298 = vmatpush1.msra.mxu0 0.0
    %299 = vmatprep.subr.mxu0 0.0
    %300 = vmatpush1.msra.mxu0 0.0
    %301 = vmatprep.subr.mxu0 0.0
    %302 = vmatpush1.msra.mxu0 0.0
    %303 = vmatprep.subr.mxu0 0.0
    %304 = vmatpush1.msra.mxu0 0.0
    %305 = vmatprep.subr.mxu0 0.0
    %306 = vmatpush1.msra.mxu0 0.0
    %307 = vmatprep.subr.mxu0 0.0
    %308 = vmatpush1.msra.mxu0 0.0
    %309 = vmatprep.subr.mxu0 0.0
    %310 = vmatpush1.msra.mxu0 0.0
    %311 = vmatprep.subr.mxu0 0.0
    %312 = vmatpush1.msra.mxu0 0.0
    %313 = vmatprep.subr.mxu0 0.0
    %314 = vmatpush1.msra.mxu0 0.0
    %315 = vmatprep.subr.mxu0 0.0
    %316 = vmatpush1.msra.mxu0 0.0
    %317 = vmatprep.subr.mxu0 0.0
    %318 = vmatpush1.msra.mxu0 0.0
    %319 = vmatprep.subr.mxu0 0.0
    %320 = vmatpush1.msra.mxu0 0.0
    %321 = vmatprep.subr.mxu0 0.0
    %322 = vmatpush1.msra.mxu0 0.0
    %323 = vmatprep.subr.mxu0 0.0
    %324 = vmatpush1.msra.mxu0 0.0
    %325 = vmatprep.mubr.f32.mxu0 0.0
    %326 = vmatmul.mubr.f32.gmra.mrb[0].mxu0 %v259
    %v327 = vpop.f32.mrb[0].mxu0
    %v328 = vadd.f32 %v144, %v327
    %v329 = vpop.f32.mrb[0].mxu0
    %330 = vdwg.mxu0
    %v331 = vmax.f32 %v328, 0.0
    %v332 = vmin.f32 %v331, 6.0
    %v333 = vld [vmem:[%s3] sm:$0xf]
    %v334 = vld [vmem:[%s4] sm:$0x1]
    %v336 = vlaneseq
    %v337 = vshrl.u32 %v336, 7
    %v338 = vsub.s32 0, %v337
    %v339 = vrot.slane %v334, %v338
    %vm341 = vcmask 31744
    %v343 = vsel %vm341, %v332, 0
    %vm345 = vcmask 1043456
    %v347 = vsel %vm345, %v333, 0
    %349 = vmatprep.subr.mxu0 0.0
    %350 = vmatpush1.msra.mxu0 %v347
    %351 = vmatprep.subr.mxu0 0.0
    %352 = vmatpush1.msra.mxu0 0.0
    %353 = vmatprep.subr.mxu0 0.0
    %354 = vmatpush1.msra.mxu0 0.0
    %355 = vmatprep.subr.mxu0 0.0
    %356 = vmatpush1.msra.mxu0 0.0
    %357 = vmatprep.subr.mxu0 0.0
    %358 = vmatpush1.msra.mxu0 0.0
    %359 = vmatprep.subr.mxu0 0.0
    %360 = vmatpush1.msra.mxu0 0.0
    %361 = vmatprep.subr.mxu0 0.0
    %362 = vmatpush1.msra.mxu0 0.0
    %363 = vmatprep.subr.mxu0 0.0
    %364 = vmatpush1.msra.mxu0 0.0
    %365 = vmatprep.subr.mxu0 0.0
    %366 = vmatpush1.msra.mxu0 0.0
    %367 = vmatprep.subr.mxu0 0.0
    %368 = vmatpush1.msra.mxu0 0.0
    %369 = vmatprep.subr.mxu0 0.0
    %370 = vmatpush1.msra.mxu0 0.0
    %371 = vmatprep.subr.mxu0 0.0
    %372 = vmatpush1.msra.mxu0 0.0
    %373 = vmatprep.subr.mxu0 0.0
    %374 = vmatpush1.msra.mxu0 0.0
    %375 = vmatprep.subr.mxu0 0.0
    %376 = vmatpush1.msra.mxu0 0.0
    %377 = vmatprep.subr.mxu0 0.0
    %378 = vmatpush1.msra.mxu0 0.0
    %379 = vmatprep.subr.mxu0 0.0
    %380 = vmatpush1.msra.mxu0 0.0
    %381 = vmatprep.subr.mxu0 0.0
    %382 = vmatpush1.msra.mxu0 0.0
    %383 = vmatprep.subr.mxu0 0.0
    %384 = vmatpush1.msra.mxu0 0.0
    %385 = vmatprep.subr.mxu0 0.0
    %386 = vmatpush1.msra.mxu0 0.0
    %387 = vmatprep.subr.mxu0 0.0
    %388 = vmatpush1.msra.mxu0 0.0
    %389 = vmatprep.subr.mxu0 0.0
    %390 = vmatpush1.msra.mxu0 0.0
    %391 = vmatprep.subr.mxu0 0.0
    %392 = vmatpush1.msra.mxu0 0.0
    %393 = vmatprep.subr.mxu0 0.0
    %394 = vmatpush1.msra.mxu0 0.0
    %395 = vmatprep.subr.mxu0 0.0
    %396 = vmatpush1.msra.mxu0 0.0
    %397 = vmatprep.subr.mxu0 0.0
    %398 = vmatpush1.msra.mxu0 0.0
    %399 = vmatprep.subr.mxu0 0.0
    %400 = vmatpush1.msra.mxu0 0.0
    %401 = vmatprep.subr.mxu0 0.0
    %402 = vmatpush1.msra.mxu0 0.0
    %403 = vmatprep.subr.mxu0 0.0
    %404 = vmatpush1.msra.mxu0 0.0
    %405 = vmatprep.subr.mxu0 0.0
    %406 = vmatpush1.msra.mxu0 0.0
    %407 = vmatprep.subr.mxu0 0.0
    %408 = vmatpush1.msra.mxu0 0.0
    %409 = vmatprep.subr.mxu0 0.0
    %410 = vmatpush1.msra.mxu0 0.0
    %411 = vmatprep.subr.mxu0 0.0
    %412 = vmatpush1.msra.mxu0 0.0
    %413 = vmatprep.mubr.f32.mxu0 0.0
    %414 = vmatmul.mubr.f32.gmra.mrb[0].mxu0 %v343
    %v415 = vpop.f32.mrb[0].mxu0
    %v416 = vadd.f32 %v339, %v415
    %v417 = vpop.f32.mrb[0].mxu0
    %418 = vdwg.mxu0
    %v419 = vadd.f32 %v416, 3.0
    %v420 = vmax.f32 %v419, 0.0
    %v421 = vmin.f32 %v420, 6.0
    %v422 = vmul.f32 %v421, 0.16666667
    %v423 = vlaneseq
    %v424 = vshrl.u32 %v423, 7
    %v425 = vsub.s32 0, %v424
    %v426 = vrot.slane %v422, %v425
    %428 = vbcast.lane.b32.xlu0 %v426, 256
    %v429 = vpop.permute.xlu0 %428
    %s431 = sor.u32 256, 8
    %432 = vbcast.lane.b32.xlu0 %v426, %s431
    %v433 = vpop.permute.xlu0 %432
    %s435 = sor.u32 256, 16
    %436 = vbcast.lane.b32.xlu0 %v426, %s435
    %v437 = vpop.permute.xlu0 %436
    %s439 = sor.u32 256, 24
    %440 = vbcast.lane.b32.xlu0 %v426, %s439
    %v441 = vpop.permute.xlu0 %440
    %s443 = sor.u32 256, 32
    %444 = vbcast.lane.b32.xlu0 %v426, %s443
    %v445 = vpop.permute.xlu0 %444
    %s447 = sor.u32 256, 40
    %448 = vbcast.lane.b32.xlu0 %v426, %s447
    %v449 = vpop.permute.xlu0 %448
    %s451 = sor.u32 256, 48
    %452 = vbcast.lane.b32.xlu0 %v426, %s451
    %v453 = vpop.permute.xlu0 %452
    %s455 = sor.u32 256, 56
    %456 = vbcast.lane.b32.xlu0 %v426, %s455
    %v457 = vpop.permute.xlu0 %456
    %v458 = vlaneseq
    %v459 = vshrl.u32 %v458, 7
    %v460 = vsub.s32 1, %v459
    %v461 = vrot.slane %v422, %v460
    %463 = vbcast.lane.b32.xlu0 %v461, 256
    %v464 = vpop.permute.xlu0 %463
    %s466 = sor.u32 256, 8
    %467 = vbcast.lane.b32.xlu0 %v461, %s466
    %v468 = vpop.permute.xlu0 %467
    %s470 = sor.u32 256, 16
    %471 = vbcast.lane.b32.xlu0 %v461, %s470
    %v472 = vpop.permute.xlu0 %471
    %s474 = sor.u32 256, 24
    %475 = vbcast.lane.b32.xlu0 %v461, %s474
    %v476 = vpop.permute.xlu0 %475
    %s478 = sor.u32 256, 32
    %479 = vbcast.lane.b32.xlu0 %v461, %s478
    %v480 = vpop.permute.xlu0 %479
    %s482 = sor.u32 256, 40
    %483 = vbcast.lane.b32.xlu0 %v461, %s482
    %v484 = vpop.permute.xlu0 %483
    %s486 = sor.u32 256, 48
    %487 = vbcast.lane.b32.xlu0 %v461, %s486
    %v488 = vpop.permute.xlu0 %487
    %s490 = sor.u32 256, 56
    %491 = vbcast.lane.b32.xlu0 %v461, %s490
    %v492 = vpop.permute.xlu0 %491
    %v493 = vmul.f32 %v35, %v429
    %v494 = vmul.f32 %v36, %v429
    %v495 = vmul.f32 %v37, %v433
    %v496 = vmul.f32 %v38, %v433
    %v497 = vmul.f32 %v39, %v437
    %v498 = vmul.f32 %v40, %v437
    %v499 = vmul.f32 %v41, %v441
    %v500 = vmul.f32 %v42, %v441
    %v501 = vmul.f32 %v43, %v445
    %v502 = vmul.f32 %v44, %v445
    %v503 = vmul.f32 %v45, %v449
    %v504 = vmul.f32 %v46, %v449
    %v505 = vmul.f32 %v47, %v453
    %v506 = vmul.f32 %v48, %v453
    %v507 = vmul.f32 %v49, %v457
    %v508 = vmul.f32 %v50, %v457
    %v509 = vmul.f32 %v51, %v464
    %v510 = vmul.f32 %v52, %v464
    %v511 = vmul.f32 %v53, %v468
    %v512 = vmul.f32 %v54, %v468
    %v513 = vmul.f32 %v55, %v472
    %v514 = vmul.f32 %v56, %v472
    %v515 = vmul.f32 %v57, %v476
    %v516 = vmul.f32 %v58, %v476
    %v517 = vmul.f32 %v59, %v480
    %v518 = vmul.f32 %v60, %v480
    %v519 = vmul.f32 %v61, %v484
    %v520 = vmul.f32 %v62, %v484
    %v521 = vmul.f32 %v63, %v488
    %v522 = vmul.f32 %v64, %v488
    %v523 = vmul.f32 %v65, %v492
    %v524 = vmul.f32 %v66, %v492
    %525 = vst [vmem:[#allocation5] sm:$0xff] %v493
    %526 = vst [vmem:[#allocation5 + $0x8] sm:$0xff] %v494
    %527 = vst [vmem:[#allocation5 + $0x10] sm:$0xff] %v495
    %528 = vst [vmem:[#allocation5 + $0x18] sm:$0xff] %v496
    %529 = vst [vmem:[#allocation5 + $0x20] sm:$0xff] %v497
    %530 = vst [vmem:[#allocation5 + $0x28] sm:$0xff] %v498
    %531 = vst [vmem:[#allocation5 + $0x30] sm:$0xff] %v499
    %532 = vst [vmem:[#allocation5 + $0x38] sm:$0xff] %v500
    %533 = vst [vmem:[#allocation5 + $0x40] sm:$0xff] %v501
    %534 = vst [vmem:[#allocation5 + $0x48] sm:$0xff] %v502
    %535 = vst [vmem:[#allocation5 + $0x50] sm:$0xff] %v503
    %536 = vst [vmem:[#allocation5 + $0x58] sm:$0xff] %v504
    %537 = vst [vmem:[#allocation5 + $0x60] sm:$0xff] %v505
    %538 = vst [vmem:[#allocation5 + $0x68] sm:$0xff] %v506
    %539 = vst [vmem:[#allocation5 + $0x70] sm:$0xff] %v507
    %540 = vst [vmem:[#allocation5 + $0x78] sm:$0xff] %v508
    %541 = vst [vmem:[#allocation5 + $0x80] sm:$0xff] %v509
    %542 = vst [vmem:[#allocation5 + $0x88] sm:$0xff] %v510
    %543 = vst [vmem:[#allocation5 + $0x90] sm:$0xff] %v511
    %544 = vst [vmem:[#allocation5 + $0x98] sm:$0xff] %v512
    %545 = vst [vmem:[#allocation5 + $0xa0] sm:$0xff] %v513
    %546 = vst [vmem:[#allocation5 + $0xa8] sm:$0xff] %v514
    %547 = vst [vmem:[#allocation5 + $0xb0] sm:$0xff] %v515
    %548 = vst [vmem:[#allocation5 + $0xb8] sm:$0xff] %v516
    %549 = vst [vmem:[#allocation5 + $0xc0] sm:$0xff] %v517
    %550 = vst [vmem:[#allocation5 + $0xc8] sm:$0xff] %v518
    %551 = vst [vmem:[#allocation5 + $0xd0] sm:$0xff] %v519
    %552 = vst [vmem:[#allocation5 + $0xd8] sm:$0xff] %v520
    %553 = vst [vmem:[#allocation5 + $0xe0] sm:$0xff] %v521
    %554 = vst [vmem:[#allocation5 + $0xe8] sm:$0xff] %v522
    %555 = vst [vmem:[#allocation5 + $0xf0] sm:$0xff] %v523
    %556 = vst [vmem:[#allocation5 + $0xf8] sm:$0xff] %v524
    // Predicated region
    $region26: #{tpu_custom_call.1} parent=1 // pred_check
      _
    $region27: #{tpu_custom_call.1} parent=1 // pred_check_branch
      %558 = sbr.rel (0) target = $region29
    $region28: #{tpu_custom_call.1} parent=1 // pred_region
      %s560 = ssub.s32 4096, 4096
      %561 = vsyncadd [#allocation4], %s560
      %s562 = sshll.u32 [#allocation5], 4
      %s563 = int_to_ptr.vmem [resolvable:$true] %s562
      %568 = dma.vmem_to_hbm [thread:$0]  %s563, 4096, %s5, [#allocation4], 256, 256, 16
    $region29: #{tpu_custom_call.1} parent=1 // pred_fallthru
      _
    // Predicated region
    $region30: #{tpu_custom_call.1} parent=1 // pred_check
      _
    $region31: #{tpu_custom_call.1} parent=1 // pred_check_branch
      %570 = sbr.rel (0) target = $region33
    $region32: #{tpu_custom_call.1} parent=1 // pred_region
      %571 = dma.done [#allocation4], 4096
    $region33: #{tpu_custom_call.1} parent=1 // pred_fallthru
      _
    %572 = vsyncpa [#allocation3], 1
    %573 = vsyncpa [#allocation4], 1

</llo_original>
